<compile_context>
chip_gen: v7x
topology: tpu7x:2x2x1
jax: 0.10.0
libtpu: 0.0.40
codegen_flags: <defaults>
</compile_context>

<pallas_src>
import functools

import jax
import jax.numpy as jnp
from jax.experimental import pallas as pl
from jax.experimental.pallas import tpu as pltpu

N_NEIGHBORS = 6


def _round_up(x, m):
    return ((x + m - 1) // m) * m


def simcomen_kernel(sphex_ref, adjT_ref, wstack_ref, bcomb_ref,
                    msg_ref, intra_ref, logz_ref, *, n_spots):
    # sphex_ref : (G, Np)  f32  gene-major sphex; gene row G-1 and spot lanes
    #                           >= n_spots are zero padding.
    # adjT_ref  : (Np, Np) bf16 (D^-1/2 A D^-1/2)^T, zero padded.
    # wstack_ref: (4G, G)  bf16 [Wc ; Wl ; nn*Wc+2*Wl ; Wl+0.5*nn*Wc]  (out, in)
    # bcomb_ref : (2G, 1)  f32  [b_conv ; b_lin] as bias columns.
    sphex = sphex_ref[...]
    n_genes, n_pad = sphex.shape

    sin_p = jnp.sin(sphex)
    cos_p = jnp.cos(sphex)

    # ---- calc_gex: gex[g] = cos(sphex[g]) * prod_{j<g} sin(sphex[j]) --------
    # Inclusive prefix product along the gene (sublane) axis as a log2(G)-depth
    # Hillis-Steele scan: full-tile VPU/XLU ops, no serial row chain.
    row = jax.lax.broadcasted_iota(jnp.int32, (n_genes, n_pad), 0)
    prod = sin_p
    shift = 1
    while shift < n_genes:
        rolled = pltpu.roll(prod, shift, axis=0)
        prod = jnp.where(row >= shift, prod * rolled, prod)
        shift *= 2
    # exclusive scan: shift down one gene row, inject the leading ones-row
    excl = jnp.where(row == 0, 1.0, pltpu.roll(prod, 1, axis=0))

    gex = excl * cos_p
    # torch.nan_to_num: sin/cos of finite inputs never give inf, only guard NaN
    gex = jnp.where(jnp.isnan(gex), 0.0, gex)
    # padded spot columns (sphex==0) would give gex[0]=1: mask them to zero so
    # the adjacency matmul and the means only see real spots.
    lane = jax.lax.broadcasted_iota(jnp.int32, (n_genes, n_pad), 1)
    gex = jnp.where(lane < n_spots, gex, 0.0)

    # ---- fused gene-space projection: (4G, G) @ (G, Np) -> (4G, Np) ---------
    xw = jnp.dot(wstack_ref[...], gex.astype(jnp.bfloat16),
                 preferred_element_type=jnp.float32)
    bcomb = bcomb_ref[...]

    # GCNConv: msg^T = (Wc @ gex^T) @ adj^T + b_conv
    # TODO(synk): for N >~ 2-3k replace the dense (Np, Np) adjacency with a
    # spot-tile grid ("parallel" across v7x's 2 TCs) or a scalar-prefetch
    # 6-neighbor gather; a dense adjacency will not fit scoped VMEM at scale.
    msg_ref[...] = (
        jnp.dot(xw[:n_genes, :].astype(jnp.bfloat16), adjT_ref[...],
                preferred_element_type=jnp.float32) + bcomb[:n_genes, :])

    # Linear: msg_intra^T = Wl @ gex^T + b_lin
    intra_ref[...] = xw[n_genes:2 * n_genes, :] + bcomb[n_genes:, :]

    # ---- log_Z_mft: matvecs rode on the stacked matmul, lane reductions only
    inv_n = jnp.float32(1.0 / n_spots)
    ns = jnp.float32(n_spots)
    mean_col = jnp.sum(gex, axis=1, keepdims=True) * inv_n                 # (G,1)
    gv = jnp.sum(xw[2 * n_genes:3 * n_genes, :], axis=1, keepdims=True) * inv_n
    mm = jnp.sum(xw[3 * n_genes:, :], axis=1, keepdims=True) * inv_n

    g = jnp.sqrt(jnp.sum(gv * gv, axis=0, keepdims=True))                  # (1,1)
    z_mean = -ns * jnp.sum(mean_col * mm, axis=0, keepdims=True)           # (1,1)
    # both branches evaluated; matches the reference value (incl. NaN at g==0)
    z_small = ns * jnp.log((jnp.exp(g) - jnp.exp(-g)) / g)
    z_big = ns * (g - jnp.log(g))
    logz_ref[...] = z_mean + jnp.where(g > 20.0, z_big, z_small)


def build_norm_adj(edge_index, num_nodes):
    """Dense D^-1/2 A D^-1/2 matching PyG gcn_norm with add_self_loops=False."""
    row = edge_index[0]   # source
    col = edge_index[1]   # target
    adj = jnp.zeros((num_nodes, num_nodes), jnp.float32).at[col, row].add(1.0)
    deg = jnp.sum(adj, axis=1)                     # in-degree of target nodes
    dinv = jnp.where(deg > 0, 1.0 / jnp.sqrt(deg), 0.0)
    return dinv[:, None] * adj * dinv[None, :]


@functools.partial(jax.jit, static_argnames=("n_neighbors",))
def simcomen_forward(sphex, edge_index, batch, w_conv, w_lin, b_conv, b_lin,
                     *, n_neighbors=N_NEIGHBORS):
    del batch  # unused by the PyTorch forward as well
    n_spots, gm1 = sphex.shape
    n_genes = gm1 + 1
    n_pad = _round_up(max(n_spots, 128), 128)   # lane-dense spot axis

    # layout plumbing kept in XLA (free relative to the kernel):
    sphex_gm = jnp.zeros((n_genes, n_pad), jnp.float32)
    sphex_gm = sphex_gm.at[:gm1, :n_spots].set(sphex.T.astype(jnp.float32))

    adj = build_norm_adj(edge_index, n_spots)
    adj_t = jnp.zeros((n_pad, n_pad), jnp.float32).at[:n_spots, :n_spots].set(adj.T)
    adj_t = adj_t.astype(jnp.bfloat16)

    nn = jnp.float32(n_neighbors)
    comb = nn * w_conv + 2.0 * w_lin                # for g
    m_mid = w_lin + 0.5 * nn * w_conv               # for z_mean
    w_stack = jnp.concatenate([w_conv, w_lin, comb, m_mid],
                              axis=0).astype(jnp.bfloat16)             # (4G, G)
    b_comb = jnp.concatenate([b_conv, b_lin]).reshape(-1, 1).astype(jnp.float32)

    # VMEM budget: everything is resident once (grid-less call) + slack for
    # gex / xw / temporaries inside the kernel.
    working = (sphex_gm.size * 4 + adj_t.size * 2 + w_stack.size * 2
               + b_comb.size * 4
               + 2 * n_genes * n_pad * 4            # msg^T, msg_intra^T
               + 6 * n_genes * n_pad * 4)           # gex / xw / temps
    vmem_limit = int(min(max(2 * working + (1 << 20), 16 << 20), 64 << 20))

    vmem = pl.BlockSpec(memory_space=pltpu.MemorySpace.VMEM)
    out_shape = (
        jax.ShapeDtypeStruct((n_genes, n_pad), jnp.float32),   # msg^T
        jax.ShapeDtypeStruct((n_genes, n_pad), jnp.float32),   # msg_intra^T
        jax.ShapeDtypeStruct((1, 1), jnp.float32),             # log_z_mft
    )
    msg_gm, intra_gm, log_z = pl.pallas_call(
        functools.partial(simcomen_kernel, n_spots=n_spots),
        out_shape=out_shape,
        in_specs=[vmem] * 4,
        out_specs=(vmem, vmem, vmem),
        compiler_params=pltpu.CompilerParams(vmem_limit_bytes=vmem_limit),
    )(sphex_gm, adj_t, w_stack, b_comb)

    # back to the module's node-major (N, G) layout, drop padded lanes
    return msg_gm[:, :n_spots].T, intra_gm[:, :n_spots].T, log_z


if __name__ == "__main__":
    key = jax.random.PRNGKey(0)
    n_spots = 32
    n_genes = 8                      # input_dim == output_dim == n_genes (square g2g)

    k1, k2, k3 = jax.random.split(key, 3)
    sphex = jax.random.uniform(k1, (n_spots, n_genes - 1), jnp.float32,
                               0.0, float(jnp.pi))
    w_conv = 0.1 * jax.random.normal(k2, (n_genes, n_genes), jnp.float32)  # g2g
    w_lin = 0.1 * jax.random.normal(k3, (n_genes, n_genes), jnp.float32)   # g2g_intra
    b_conv = jnp.zeros((n_genes,), jnp.float32)   # set_g2g sets bias to zeros
    b_lin = jnp.zeros((n_genes,), jnp.float32)    # set_g2g_intra sets bias to zeros

    # deterministic ring graph: each spot gets n_neighbors = 6 neighbors (±1,±2,±3)
    src, dst = [], []
    for i in range(n_spots):
        for d in (1, 2, 3):
            for j in (i + d, i - d):
                src.append(j % n_spots)
                dst.append(i)
    edge_index = jnp.array([src, dst], dtype=jnp.int32)   # (2, 192)
    batch = jnp.zeros((n_spots,), jnp.int32)               # unused

    msg, msg_intra, log_z_mft = simcomen_forward(
        sphex, edge_index, batch, w_conv, w_lin, b_conv, b_lin)
    jax.block_until_ready((msg, msg_intra, log_z_mft))
    print("KERNEL_OK")
</pallas_src>

<mosaic_0001>
module attributes {stable_mosaic.version = 11 : i64} {
  func.func private @main(%arg0: i32) attributes {dimension_semantics = [#tpu.dimension_semantics<core_parallel>], iteration_bounds = array<i64: 2>, tpu.core_type = #tpu.core_type<sc_scalar_subcore>, window_params = []} {
    return
  }
}

module attributes {stable_mosaic.version = 11 : i64} {
  func.func private @main(%arg0: i32) attributes {dimension_semantics = [#tpu.dimension_semantics<core_parallel>], iteration_bounds = array<i64: 2>, tpu.core_type = #tpu.core_type<sc_scalar_subcore>, window_params = []} {
    return
  }
}

module attributes {stable_mosaic.version = 11 : i64} {
  func.func @simcomen_kernel(%arg0: memref<8x128xf32, #tpu.memory_space<vmem>>, %arg1: memref<128x128xbf16, #tpu.memory_space<vmem>>, %arg2: memref<32x8xbf16, #tpu.memory_space<vmem>>, %arg3: memref<16x1xf32, #tpu.memory_space<vmem>>, %arg4: memref<8x128xf32, #tpu.memory_space<vmem>>, %arg5: memref<8x128xf32, #tpu.memory_space<vmem>>, %arg6: memref<1x1xf32, #tpu.memory_space<vmem>>) attributes {dimension_semantics = [], scalar_prefetch = 0 : i64, scratch_operands = 0 : i64, tpu.core_type = #tpu.core_type<tc>} {
    %c0 = arith.constant 0 : index
    %c0_0 = arith.constant 0 : index
    %0 = vector.load %arg0[%c0, %c0_0] : memref<8x128xf32, #tpu.memory_space<vmem>>, vector<8x128xf32>
    %1 = math.sin %0 : vector<8x128xf32>
    %2 = math.cos %0 : vector<8x128xf32>
    %3 = tpu.iota {dimensions = array<i32: 0>} : vector<8x128xi32>
    %c1_i32 = arith.constant 1 : i32
    %4 = tpu.dynamic_rotate %1 by %c1_i32 dim 0 : vector<8x128xf32>, i32 -> vector<8x128xf32>
    %c1_i32_1 = arith.constant 1 : i32
    %5 = vector.broadcast %c1_i32_1 : i32 to vector<8x128xi32>
    %6 = arith.cmpi sge, %3, %5 : vector<8x128xi32>
    %7 = arith.mulf %1, %4 : vector<8x128xf32>
    %8 = arith.select %6, %7, %1 : vector<8x128xi1>, vector<8x128xf32>
    %c2_i32 = arith.constant 2 : i32
    %9 = tpu.dynamic_rotate %8 by %c2_i32 dim 0 : vector<8x128xf32>, i32 -> vector<8x128xf32>
    %c2_i32_2 = arith.constant 2 : i32
    %10 = vector.broadcast %c2_i32_2 : i32 to vector<8x128xi32>
    %11 = arith.cmpi sge, %3, %10 : vector<8x128xi32>
    %12 = arith.mulf %8, %9 : vector<8x128xf32>
    %13 = arith.select %11, %12, %8 : vector<8x128xi1>, vector<8x128xf32>
    %c4_i32 = arith.constant 4 : i32
    %14 = tpu.dynamic_rotate %13 by %c4_i32 dim 0 : vector<8x128xf32>, i32 -> vector<8x128xf32>
    %c4_i32_3 = arith.constant 4 : i32
    %15 = vector.broadcast %c4_i32_3 : i32 to vector<8x128xi32>
    %16 = arith.cmpi sge, %3, %15 : vector<8x128xi32>
    %17 = arith.mulf %13, %14 : vector<8x128xf32>
    %18 = arith.select %16, %17, %13 : vector<8x128xi1>, vector<8x128xf32>
    %c0_i32 = arith.constant 0 : i32
    %19 = vector.broadcast %c0_i32 : i32 to vector<8x128xi32>
    %20 = arith.cmpi eq, %3, %19 : vector<8x128xi32>
    %c1_i32_4 = arith.constant 1 : i32
    %21 = tpu.dynamic_rotate %18 by %c1_i32_4 dim 0 : vector<8x128xf32>, i32 -> vector<8x128xf32>
    %cst = arith.constant 1.000000e+00 : f32
    %22 = vector.broadcast %cst : f32 to vector<8x128xf32>
    %23 = arith.select %20, %22, %21 : vector<8x128xi1>, vector<8x128xf32>
    %24 = arith.mulf %23, %2 : vector<8x128xf32>
    %25 = arith.cmpf one, %24, %24 : vector<8x128xf32>
    %cst_5 = arith.constant 0.000000e+00 : f32
    %26 = vector.broadcast %cst_5 : f32 to vector<8x128xf32>
    %27 = arith.select %25, %26, %24 : vector<8x128xi1>, vector<8x128xf32>
    %28 = tpu.iota {dimensions = array<i32: 1>} : vector<8x128xi32>
    %c32_i32 = arith.constant 32 : i32
    %29 = vector.broadcast %c32_i32 : i32 to vector<8x128xi32>
    %30 = arith.cmpi slt, %28, %29 : vector<8x128xi32>
    %cst_6 = arith.constant 0.000000e+00 : f32
    %31 = vector.broadcast %cst_6 : f32 to vector<8x128xf32>
    %32 = arith.select %30, %27, %31 : vector<8x128xi1>, vector<8x128xf32>
    %c0_7 = arith.constant 0 : index
    %c0_8 = arith.constant 0 : index
    %33 = vector.load %arg2[%c0_7, %c0_8] : memref<32x8xbf16, #tpu.memory_space<vmem>>, vector<32x8xbf16>
    %34 = arith.truncf %32 : vector<8x128xf32> to vector<8x128xbf16>
    %cst_9 = arith.constant dense<0.000000e+00> : vector<32x128xf32>
    %35 = tpu.matmul %33, %34, %cst_9 {dimension_numbers = #tpu.dot_dimension_numbers<[1], [0], [0], [1], [0, 0, 1, 1], [], []>} : vector<32x8xbf16>, vector<8x128xbf16>, vector<32x128xf32> -> vector<32x128xf32>
    %c0_10 = arith.constant 0 : index
    %c0_11 = arith.constant 0 : index
    %36 = vector.load %arg3[%c0_10, %c0_11] : memref<16x1xf32, #tpu.memory_space<vmem>>, vector<16x1xf32>
    %37 = vector.extract_strided_slice %35 {offsets = [0, 0], sizes = [8, 128], strides = [1, 1]} : vector<32x128xf32> to vector<8x128xf32>
    %38 = arith.truncf %37 : vector<8x128xf32> to vector<8x128xbf16>
    %c0_12 = arith.constant 0 : index
    %c0_13 = arith.constant 0 : index
    %39 = vector.load %arg1[%c0_12, %c0_13] : memref<128x128xbf16, #tpu.memory_space<vmem>>, vector<128x128xbf16>
    %cst_14 = arith.constant dense<0.000000e+00> : vector<8x128xf32>
    %40 = tpu.matmul %38, %39, %cst_14 {dimension_numbers = #tpu.dot_dimension_numbers<[1], [0], [0], [1], [0, 0, 1, 1], [], []>} : vector<8x128xbf16>, vector<128x128xbf16>, vector<8x128xf32> -> vector<8x128xf32>
    %41 = vector.extract_strided_slice %36 {offsets = [0, 0], sizes = [8, 1], strides = [1, 1]} : vector<16x1xf32> to vector<8x1xf32>
    %42 = vector.broadcast %41 : vector<8x1xf32> to vector<8x128xf32>
    %43 = arith.addf %40, %42 : vector<8x128xf32>
    %c0_15 = arith.constant 0 : index
    %c0_16 = arith.constant 0 : index
    %44 = vector.load %arg4[%c0_15, %c0_16] : memref<8x128xf32, #tpu.memory_space<vmem>>, vector<8x128xf32>
    tpu.vector_store %arg4[%c0_15, %c0_16], %43 {strides = array<i32>} : memref<8x128xf32, #tpu.memory_space<vmem>>, vector<8x128xf32>,
    %45 = vector.extract_strided_slice %35 {offsets = [8, 0], sizes = [8, 128], strides = [1, 1]} : vector<32x128xf32> to vector<8x128xf32>
    %46 = vector.extract_strided_slice %36 {offsets = [8, 0], sizes = [8, 1], strides = [1, 1]} : vector<16x1xf32> to vector<8x1xf32>
    %47 = vector.broadcast %46 : vector<8x1xf32> to vector<8x128xf32>
    %48 = arith.addf %45, %47 : vector<8x128xf32>
    %c0_17 = arith.constant 0 : index
    %c0_18 = arith.constant 0 : index
    %49 = vector.load %arg5[%c0_17, %c0_18] : memref<8x128xf32, #tpu.memory_space<vmem>>, vector<8x128xf32>
    tpu.vector_store %arg5[%c0_17, %c0_18], %48 {strides = array<i32>} : memref<8x128xf32, #tpu.memory_space<vmem>>, vector<8x128xf32>,
    %cst_19 = arith.constant dense<0.000000e+00> : vector<8xf32>
    %50 = vector.multi_reduction <add>, %32, %cst_19 [1] : vector<8x128xf32> to vector<8xf32>
    %51 = vector.shape_cast %50 : vector<8xf32> to vector<8x1xf32>
    %cst_20 = arith.constant 3.125000e-02 : f32
    %52 = vector.broadcast %cst_20 : f32 to vector<8x1xf32>
    %53 = arith.mulf %51, %52 : vector<8x1xf32>
    %54 = vector.extract_strided_slice %35 {offsets = [16, 0], sizes = [8, 128], strides = [1, 1]} : vector<32x128xf32> to vector<8x128xf32>
    %cst_21 = arith.constant dense<0.000000e+00> : vector<8xf32>
    %55 = vector.multi_reduction <add>, %54, %cst_21 [1] : vector<8x128xf32> to vector<8xf32>
    %56 = vector.shape_cast %55 : vector<8xf32> to vector<8x1xf32>
    %cst_22 = arith.constant 3.125000e-02 : f32
    %57 = vector.broadcast %cst_22 : f32 to vector<8x1xf32>
    %58 = arith.mulf %56, %57 : vector<8x1xf32>
    %59 = vector.extract_strided_slice %35 {offsets = [24, 0], sizes = [8, 128], strides = [1, 1]} : vector<32x128xf32> to vector<8x128xf32>
    %cst_23 = arith.constant dense<0.000000e+00> : vector<8xf32>
    %60 = vector.multi_reduction <add>, %59, %cst_23 [1] : vector<8x128xf32> to vector<8xf32>
    %61 = vector.shape_cast %60 : vector<8xf32> to vector<8x1xf32>
    %cst_24 = arith.constant 3.125000e-02 : f32
    %62 = vector.broadcast %cst_24 : f32 to vector<8x1xf32>
    %63 = arith.mulf %61, %62 : vector<8x1xf32>
    %64 = arith.mulf %58, %58 : vector<8x1xf32>
    %cst_25 = arith.constant dense<0.000000e+00> : vector<1xf32>
    %65 = vector.multi_reduction <add>, %64, %cst_25 [0] : vector<8x1xf32> to vector<1xf32>
    %66 = vector.shape_cast %65 : vector<1xf32> to vector<1x1xf32>
    %67 = math.sqrt %66 : vector<1x1xf32>
    %cst_26 = arith.constant 0.000000e+00 : f32
    %cst_27 = arith.constant 3.200000e+01 : f32
    %68 = arith.subf %cst_26, %cst_27 : f32
    %69 = arith.mulf %53, %63 : vector<8x1xf32>
    %cst_28 = arith.constant dense<0.000000e+00> : vector<1xf32>
    %70 = vector.multi_reduction <add>, %69, %cst_28 [0] : vector<8x1xf32> to vector<1xf32>
    %71 = vector.shape_cast %70 : vector<1xf32> to vector<1x1xf32>
    %72 = vector.broadcast %68 : f32 to vector<1x1xf32>
    %73 = arith.mulf %72, %71 : vector<1x1xf32>
    %74 = math.exp %67 : vector<1x1xf32>
    %cst_29 = arith.constant 0.000000e+00 : f32
    %75 = vector.broadcast %cst_29 : f32 to vector<1x1xf32>
    %76 = arith.subf %75, %67 : vector<1x1xf32>
    %77 = math.exp %76 : vector<1x1xf32>
    %78 = arith.subf %74, %77 : vector<1x1xf32>
    %79 = arith.divf %78, %67 : vector<1x1xf32>
    %80 = math.log %79 : vector<1x1xf32>
    %cst_30 = arith.constant 3.200000e+01 : f32
    %81 = vector.broadcast %cst_30 : f32 to vector<1x1xf32>
    %82 = arith.mulf %81, %80 : vector<1x1xf32>
    %83 = math.log %67 : vector<1x1xf32>
    %84 = arith.subf %67, %83 : vector<1x1xf32>
    %cst_31 = arith.constant 3.200000e+01 : f32
    %85 = vector.broadcast %cst_31 : f32 to vector<1x1xf32>
    %86 = arith.mulf %85, %84 : vector<1x1xf32>
    %cst_32 = arith.constant 2.000000e+01 : f32
    %87 = vector.broadcast %cst_32 : f32 to vector<1x1xf32>
    %88 = arith.cmpf ogt, %67, %87 : vector<1x1xf32>
    %89 = arith.select %88, %86, %82 : vector<1x1xi1>, vector<1x1xf32>
    %90 = arith.addf %73, %89 : vector<1x1xf32>
    %c0_33 = arith.constant 0 : index
    %c0_34 = arith.constant 0 : index
    %91 = vector.load %arg6[%c0_33, %c0_34] : memref<1x1xf32, #tpu.memory_space<vmem>>, vector<1x1xf32>
    tpu.vector_store %arg6[%c0_33, %c0_34], %90 {strides = array<i32>} : memref<1x1xf32, #tpu.memory_space<vmem>>, vector<1x1xf32>,
    return
  }
}

</mosaic_0001>

<llo_original>
// kernel: simcomen_forward.1
$region0: #{simcomen_forward.1}
  #allocation0 [shape = 'u32[]', space=smem, size = 0x4, offset = 0x4, fixed_abs, tag = 'smem constant byte address 0x4 - core index']
  #allocation1 [shape = 'u32[144,128]{1,0:T(1,128)}', space=vmem, size = 0x12000, scoped, tag = 'internal scratch']
  %s0 = inlined_call_operand.vmem [shape: f32[8,128], index: 0, kind: input, shape index: {}]
  %s1 = inlined_call_operand.vmem [shape: bf16[128,128], index: 1, kind: input, shape index: {}]
  %s2 = inlined_call_operand.vmem [shape: bf16[32,8], index: 2, kind: input, shape index: {}]
  %s3 = inlined_call_operand.vmem [shape: f32[16,1], index: 3, kind: input, shape index: {}]
  %s4 = inlined_call_operand.vmem [shape: f32[8,128], index: 4, kind: output, shape index: {0}]
  %s5 = inlined_call_operand.vmem [shape: f32[8,128], index: 5, kind: output, shape index: {1}]
  %s6 = inlined_call_operand.hbm [shape: f32[1,1], index: 6, kind: output, shape index: {2}]
  %7 = xla_tuple %s4, %s5, %s6
  %s8 = sld [smem:[#allocation0]]
  $region42: #{simcomen_forward.1} parent=0
    _
  %s10 = ssub.s32 1, %s8
  %s11 = scalar_select 0, %s10, %s8
  $region1: #{simcomen_forward.1} parent=0
    #allocation2 [shape = 'u8[512]{0}', space=vmem, size = 0x400, scoped, tag = 'output window, operand 2, single buffered']
    #allocation3 [shape = 's32[1]{0}', space=sflag, size = 0x4, scoped, tag = 'scoped memory for simcomen_forward.1']
    %12 = vsyncpa [#allocation3], 0
    // Predicated region
    $region2: #{simcomen_forward.1} parent=1 // pred_check
      _
    $region3: #{simcomen_forward.1} parent=1 // pred_check_branch
      %14 = sbr.rel (0) target = $region5
    $region4: #{simcomen_forward.1} parent=1 // pred_region
      _
    $region5: #{simcomen_forward.1} parent=1 // pred_fallthru
      _
    // Predicated region
    $region6: #{simcomen_forward.1} parent=1 // pred_check
      _
    $region7: #{simcomen_forward.1} parent=1 // pred_check_branch
      %16 = sbr.rel (0) target = $region9
    $region8: #{simcomen_forward.1} parent=1 // pred_region
      _
    $region9: #{simcomen_forward.1} parent=1 // pred_fallthru
      _
    // Predicated region
    $region10: #{simcomen_forward.1} parent=1 // pred_check
      _
    $region11: #{simcomen_forward.1} parent=1 // pred_check_branch
      %18 = sbr.rel (0) target = $region13
    $region12: #{simcomen_forward.1} parent=1 // pred_region
      _
    $region13: #{simcomen_forward.1} parent=1 // pred_fallthru
      _
    // Predicated region
    $region14: #{simcomen_forward.1} parent=1 // pred_check
      _
    $region15: #{simcomen_forward.1} parent=1 // pred_check_branch
      %20 = sbr.rel (0) target = $region17
    $region16: #{simcomen_forward.1} parent=1 // pred_region
      _
    $region17: #{simcomen_forward.1} parent=1 // pred_fallthru
      _
    %v22 = vld [vmem:[%s0] sm:$0xff]
    %v23 = vand.u32 2147483647, %v22
    %vm24 = vcmp.le.f32.partialorder %v23, 0.7853982
    %vm25 = vcmp.lt.s32.totalorder %v22, 0
    %v26 = vand.u32 %v22, 2139095040
    %v27 = vshrl.u32 %v26, 23
    %v28 = vsub.s32 %v27, 127
    %v29 = vand.u32 2147483647, %v22
    %v30 = vand.u32 %v29, 8388607
    %v31 = vor.u32 %v30, 8388608
    %v32 = vsub.s32 0, %v31
    %v33 = vadd.s32 %v28, 1
    %vm34 = vcmp.gt.s32.totalorder %v33, 0
    %v35 = vsel %vm34, %v33, 0
    %v36 = vshrl.u32 %v35, 5
    %v37 = vand.u32 %v35, 31
    %v38 = vsub.s32 32, %v37
    %v39 = vshrl.u32 683565275, %v38
    %v40 = vshll.u32 683565275, %v37
    %v41 = vshrl.u32 2475754826, %v38
    %v42 = vor.u32 %v40, %v41
    %v43 = vshll.u32 2475754826, %v37
    %v44 = vshrl.u32 2131351028, %v38
    %v45 = vor.u32 %v43, %v44
    %v46 = vshll.u32 2131351028, %v37
    %v47 = vshrl.u32 2102212464, %v38
    %v48 = vor.u32 %v46, %v47
    %v49 = vshll.u32 2102212464, %v37
    %v50 = vshrl.u32 920167782, %v38
    %v51 = vor.u32 %v49, %v50
    %v52 = vshll.u32 920167782, %v37
    %v53 = vshrl.u32 1326507024, %v38
    %v54 = vor.u32 %v52, %v53
    %vm55 = vcmp.lt.s32.totalorder %v36, 1
    %vm56 = vcmp.lt.s32.totalorder %v36, 2
    %vm57 = vcmp.lt.s32.totalorder %v36, 3
    %vm58 = vcmp.lt.s32.totalorder %v36, 4
    %v59 = vsel %vm55, %v39, %v42
    %v60 = vsel %vm58, %v48, 2102212464
    %v61 = vsel %vm57, %v45, %v60
    %v62 = vsel %vm56, %v59, %v61
    %v63 = vsel %vm55, %v42, %v45
    %v64 = vsel %vm58, %v51, 920167782
    %v65 = vsel %vm57, %v48, %v64
    %v66 = vsel %vm56, %v63, %v65
    %v67 = vsel %vm55, %v45, %v48
    %v68 = vsel %vm58, %v54, 1326507024
    %v69 = vsel %vm57, %v51, %v68
    %v70 = vsel %vm56, %v67, %v69
    %v71 = vshll.u32 %v31, 8
    %v72 = vmul.u32.u64.compose %v71, %v70
    %v73 = vextract.low.u32 %v72
    %v74 = vextract.high.u32 %v72
    %v75 = vmul.u32.u64.compose %v71, %v66
    %v76 = vextract.low.u32 %v75
    %v77 = vextract.high.u32 %v75
    %v78 = vmul.u32 %v71, %v62
    %v79 = vadd.s32 %v74, %v76
    %vm80 = vc.u32 %v74, %v76
    %v81 = vadd.s32 %v77, 1
    %v82 = vsel %vm80, %v81, %v77
    %v83 = vadd.s32 %v78, %v82
    %v84 = vadd.s32 %v83, 536870912
    %v85 = vshrl.u32 %v84, 30
    %v86 = vshll.u32 %v85, 30
    %v87 = vsub.s32 %v83, %v86
    %vm88 = vcmp.lt.s32.totalorder %v87, 0
    %v89 = vsub.s32 0, %v87
    %v90 = vsel %vm88, %v89, %v87
    %v91 = vclz %v90
    %v92 = vsub.s32 %v91, 2
    %vm93 = vcmp.gt.s32.totalorder 0, %v92
    %v94 = vsel %vm93, 0, %v92
    %v95 = vsub.s32 32, %v94
    %v96 = vshll.u32 %v87, %v94
    %v97 = vshrl.u32 %v79, %v95
    %v98 = vor.u32 %v96, %v97
    %v99 = vsub.s32 4294967266, %v94
    %v100 = vadd.s32 %v99, 127
    %v101 = vshll.u32 %v100, 23
    %v102 = vor.u32 4788187, %v101
    %v103 = vand.u32 2147483647, %v102
    %v105 = vcvt.s32.f32 %v98
    %v106 = vmul.f32 %v105, %v103
    %v107 = vxor.u32 %v106, 2147483648
    %v108 = vsel %vm25, %v107, %v106
    %v109 = vsub.s32 4, %v85
    %v110 = vsel %vm25, %v109, %v85
    %v111 = vsel %vm24, %v22, %v108
    %v112 = vsel %vm24, 0, %v110
    %v113 = vcosq.f32.pop %v111
    %v114 = vsinq.f32.pop %v111
    %vm115 = vweird.f32 %v22
    %v116 = vadd.s32 %v112, 3
    %v117 = vand.u32 %v116, 3
    %vm118 = vcmp.lt.s32.totalorder %v117, 2
    %vm119 = vcmp.eq.s32.totalorder %v117, 0
    %v120 = vxor.u32 %v114, 2147483648
    %v121 = vsel %vm119, %v113, %v120
    %vm122 = vcmp.eq.s32.totalorder %v117, 2
    %v123 = vxor.u32 %v113, 2147483648
    %v124 = vsel %vm122, %v123, %v114
    %v125 = vsel %vm118, %v121, %v124
    %v126 = vsel %vm115, nan, %v125
    %v127 = vand.u32 2147483647, %v22
    %vm128 = vcmp.le.f32.partialorder %v127, 0.7853982
    %vm129 = vcmp.lt.s32.totalorder %v22, 0
    %v130 = vand.u32 %v22, 2139095040
    %v131 = vshrl.u32 %v130, 23
    %v132 = vsub.s32 %v131, 127
    %v133 = vand.u32 2147483647, %v22
    %v134 = vand.u32 %v133, 8388607
    %v135 = vor.u32 %v134, 8388608
    %v136 = vsub.s32 0, %v135
    %v137 = vadd.s32 %v132, 1
    %vm138 = vcmp.gt.s32.totalorder %v137, 0
    %v139 = vsel %vm138, %v137, 0
    %v140 = vshrl.u32 %v139, 5
    %v141 = vand.u32 %v139, 31
    %v142 = vsub.s32 32, %v141
    %v143 = vshrl.u32 683565275, %v142
    %v144 = vshll.u32 683565275, %v141
    %v145 = vshrl.u32 2475754826, %v142
    %v146 = vor.u32 %v144, %v145
    %v147 = vshll.u32 2475754826, %v141
    %v148 = vshrl.u32 2131351028, %v142
    %v149 = vor.u32 %v147, %v148
    %v150 = vshll.u32 2131351028, %v141
    %v151 = vshrl.u32 2102212464, %v142
    %v152 = vor.u32 %v150, %v151
    %v153 = vshll.u32 2102212464, %v141
    %v154 = vshrl.u32 920167782, %v142
    %v155 = vor.u32 %v153, %v154
    %v156 = vshll.u32 920167782, %v141
    %v157 = vshrl.u32 1326507024, %v142
    %v158 = vor.u32 %v156, %v157
    %vm159 = vcmp.lt.s32.totalorder %v140, 1
    %vm160 = vcmp.lt.s32.totalorder %v140, 2
    %vm161 = vcmp.lt.s32.totalorder %v140, 3
    %vm162 = vcmp.lt.s32.totalorder %v140, 4
    %v163 = vsel %vm159, %v143, %v146
    %v164 = vsel %vm162, %v152, 2102212464
    %v165 = vsel %vm161, %v149, %v164
    %v166 = vsel %vm160, %v163, %v165
    %v167 = vsel %vm159, %v146, %v149
    %v168 = vsel %vm162, %v155, 920167782
    %v169 = vsel %vm161, %v152, %v168
    %v170 = vsel %vm160, %v167, %v169
    %v171 = vsel %vm159, %v149, %v152
    %v172 = vsel %vm162, %v158, 1326507024
    %v173 = vsel %vm161, %v155, %v172
    %v174 = vsel %vm160, %v171, %v173
    %v175 = vshll.u32 %v135, 8
    %v176 = vmul.u32.u64.compose %v175, %v174
    %v177 = vextract.low.u32 %v176
    %v178 = vextract.high.u32 %v176
    %v179 = vmul.u32.u64.compose %v175, %v170
    %v180 = vextract.low.u32 %v179
    %v181 = vextract.high.u32 %v179
    %v182 = vmul.u32 %v175, %v166
    %v183 = vadd.s32 %v178, %v180
    %vm184 = vc.u32 %v178, %v180
    %v185 = vadd.s32 %v181, 1
    %v186 = vsel %vm184, %v185, %v181
    %v187 = vadd.s32 %v182, %v186
    %v188 = vadd.s32 %v187, 536870912
    %v189 = vshrl.u32 %v188, 30
    %v190 = vshll.u32 %v189, 30
    %v191 = vsub.s32 %v187, %v190
    %vm192 = vcmp.lt.s32.totalorder %v191, 0
    %v193 = vsub.s32 0, %v191
    %v194 = vsel %vm192, %v193, %v191
    %v195 = vclz %v194
    %v196 = vsub.s32 %v195, 2
    %vm197 = vcmp.gt.s32.totalorder 0, %v196
    %v198 = vsel %vm197, 0, %v196
    %v199 = vsub.s32 32, %v198
    %v200 = vshll.u32 %v191, %v198
    %v201 = vshrl.u32 %v183, %v199
    %v202 = vor.u32 %v200, %v201
    %v203 = vsub.s32 4294967266, %v198
    %v204 = vadd.s32 %v203, 127
    %v205 = vshll.u32 %v204, 23
    %v206 = vor.u32 4788187, %v205
    %v207 = vand.u32 2147483647, %v206
    %v209 = vcvt.s32.f32 %v202
    %v210 = vmul.f32 %v209, %v207
    %v211 = vxor.u32 %v210, 2147483648
    %v212 = vsel %vm129, %v211, %v210
    %v213 = vsub.s32 4, %v189
    %v214 = vsel %vm129, %v213, %v189
    %v215 = vsel %vm128, %v22, %v212
    %v216 = vsel %vm128, 0, %v214
    %v217 = vcosq.f32.pop %v215
    %v218 = vsinq.f32.pop %v215
    %vm219 = vweird.f32 %v22
    %v220 = vand.u32 %v216, 3
    %vm221 = vcmp.lt.s32.totalorder %v220, 2
    %vm222 = vcmp.eq.s32.totalorder %v220, 0
    %v223 = vxor.u32 %v218, 2147483648
    %v224 = vsel %vm222, %v217, %v223
    %vm225 = vcmp.eq.s32.totalorder %v220, 2
    %v226 = vxor.u32 %v217, 2147483648
    %v227 = vsel %vm225, %v226, %v218
    %v228 = vsel %vm221, %v224, %v227
    %v229 = vsel %vm219, nan, %v228
    %v230 = vlaneseq
    %v231 = vshrl.u32 %v230, 7
    %v232 = vrot.slane %v126, 7
    %vm233 = vcmp.ge.s32.totalorder %v231, 1
    %v234 = vmul.f32 %v126, %v232
    %v235 = vsel %vm233, %v234, %v126
    %v236 = vrot.slane %v235, 6
    %vm237 = vcmp.ge.s32.totalorder %v231, 2
    %v238 = vmul.f32 %v235, %v236
    %v239 = vsel %vm237, %v238, %v235
    %v240 = vrot.slane %v239, 4
    %vm241 = vcmp.ge.s32.totalorder %v231, 4
    %v242 = vmul.f32 %v239, %v240
    %v243 = vsel %vm241, %v242, %v239
    %vm244 = vcmp.eq.s32.totalorder %v231, 0
    %v245 = vrot.slane %v243, 7
    %v246 = vsel %vm244, 1.0, %v245
    %v247 = vmul.f32 %v246, %v229
    %vm248 = vcmp.ne.f32.partialorder %v247, %v247
    %v249 = vsel %vm248, 0.0, %v247
    %v250 = vlaneseq
    %v251 = vand.u32 %v250, 127
    %vm252 = vcmp.lt.s32.totalorder %v251, 32
    %v253 = vsel %vm252, %v249, 0.0
    %v254 = vld [vmem:[%s2] sm:$0xf]
    %v255 = vld [vmem:[%s2 + $0x4] sm:$0xf]
    %v256 = vld [vmem:[%s2 + $0x8] sm:$0xf]
    %v257 = vld [vmem:[%s2 + $0xc] sm:$0xf]
    %v258 = vpack.c.bf16 %v253, %v253
    %v263 = vunpack.c.l.b16 %v254
    %v264 = vunpack.c.l.b16 %v255
    %v265 = vunpack.c.l.b16 %v256
    %v266 = vunpack.c.l.b16 %v257
    %v267 = vpack.c.b16 %v264, %v263
    %v268 = vpack.c.b16 %v266, %v265
    %vm269 = vcmask 64512
    %v271 = vsel %vm269, %v267, 0
    %v274 = vsel %vm269, %v268, 0
    %vm276 = vcmask 1043456
    %v278 = vsel %vm276, %v258, 0
    %280 = vmatprep.subr.bf16.mxu0 0
    %281 = vmatpush1.bf16.msra.mxu0 %v278
    %282 = vmatprep.subr.bf16.mxu0 0
    %283 = vmatpush1.bf16.msra.mxu0 0
    %284 = vmatprep.subr.bf16.mxu0 0
    %285 = vmatpush1.bf16.msra.mxu0 0
    %286 = vmatprep.subr.bf16.mxu0 0
    %287 = vmatpush1.bf16.msra.mxu0 0
    %288 = vmatprep.subr.bf16.mxu0 0
    %289 = vmatpush1.bf16.msra.mxu0 0
    %290 = vmatprep.subr.bf16.mxu0 0
    %291 = vmatpush1.bf16.msra.mxu0 0
    %292 = vmatprep.subr.bf16.mxu0 0
    %293 = vmatpush1.bf16.msra.mxu0 0
    %294 = vmatprep.subr.bf16.mxu0 0
    %295 = vmatpush1.bf16.msra.mxu0 0
    %296 = vmatprep.subr.bf16.mxu0 0
    %297 = vmatpush1.bf16.msra.mxu0 0
    %298 = vmatprep.subr.bf16.mxu0 0
    %299 = vmatpush1.bf16.msra.mxu0 0
    %300 = vmatprep.subr.bf16.mxu0 0
    %301 = vmatpush1.bf16.msra.mxu0 0
    %302 = vmatprep.subr.bf16.mxu0 0
    %303 = vmatpush1.bf16.msra.mxu0 0
    %304 = vmatprep.subr.bf16.mxu0 0
    %305 = vmatpush1.bf16.msra.mxu0 0
    %306 = vmatprep.subr.bf16.mxu0 0
    %307 = vmatpush1.bf16.msra.mxu0 0
    %308 = vmatprep.subr.bf16.mxu0 0
    %309 = vmatpush1.bf16.msra.mxu0 0
    %310 = vmatprep.subr.bf16.mxu0 0
    %311 = vmatpush1.bf16.msra.mxu0 0
    %312 = vmatprep.mubr.bf16.mxu0 0
    %313 = vmatmul.mubr.bf16.gmra.mrb[0].mxu0 %v271
    %v314 = vpop.f32.mrb[0].mxu0
    %v315 = vadd.f32 0.0, %v314
    %v316 = vpop.f32.mrb[0].mxu0
    %v317 = vpop.f32.mrb[0].mxu0
    %v318 = vadd.f32 0.0, %v317
    %v319 = vpop.f32.mrb[0].mxu0
    %320 = vmatprep.mubr.bf16.mxu0 0
    %321 = vmatmul.mubr.bf16.gmra.mrb[0].mxu0 %v274
    %v322 = vpop.f32.mrb[0].mxu0
    %v323 = vadd.f32 0.0, %v322
    %v324 = vpop.f32.mrb[0].mxu0
    %v325 = vpop.f32.mrb[0].mxu0
    %v326 = vadd.f32 0.0, %v325
    %v327 = vpop.f32.mrb[0].mxu0
    %328 = vdwg.mxu0
    %v329 = vld [vmem:[%s3] sm:$0xff]
    %v330 = vld [vmem:[%s3 + $0x8] sm:$0xff]
    %v331 = vpack.c.bf16 %v315, %v315
    %v332 = vld [vmem:[%s1] sm:$0xf]
    %v333 = vld [vmem:[%s1 + $0x4] sm:$0xf]
    %v334 = vld [vmem:[%s1 + $0x8] sm:$0xf]
    %v335 = vld [vmem:[%s1 + $0xc] sm:$0xf]
    %v336 = vld [vmem:[%s1 + $0x10] sm:$0xf]
    %v337 = vld [vmem:[%s1 + $0x14] sm:$0xf]
    %v338 = vld [vmem:[%s1 + $0x18] sm:$0xf]
    %v339 = vld [vmem:[%s1 + $0x1c] sm:$0xf]
    %v340 = vld [vmem:[%s1 + $0x20] sm:$0xf]
    %v341 = vld [vmem:[%s1 + $0x24] sm:$0xf]
    %v342 = vld [vmem:[%s1 + $0x28] sm:$0xf]
    %v343 = vld [vmem:[%s1 + $0x2c] sm:$0xf]
    %v344 = vld [vmem:[%s1 + $0x30] sm:$0xf]
    %v345 = vld [vmem:[%s1 + $0x34] sm:$0xf]
    %v346 = vld [vmem:[%s1 + $0x38] sm:$0xf]
    %v347 = vld [vmem:[%s1 + $0x3c] sm:$0xf]
    %349 = vset.pattern.permute.xlu0 0
    %350 = vperm.xlu0 %349, %v329
    %v351 = vpop.permute.xlu0 %350
    %v369 = vunpack.c.l.b16 %v332
    %v370 = vunpack.c.l.b16 %v333
    %v371 = vunpack.c.l.b16 %v334
    %v372 = vunpack.c.l.b16 %v335
    %v373 = vunpack.c.l.b16 %v336
    %v374 = vunpack.c.l.b16 %v337
    %v375 = vunpack.c.l.b16 %v338
    %v376 = vunpack.c.l.b16 %v339
    %v377 = vunpack.c.l.b16 %v340
    %v378 = vunpack.c.l.b16 %v341
    %v379 = vunpack.c.l.b16 %v342
    %v380 = vunpack.c.l.b16 %v343
    %v381 = vunpack.c.l.b16 %v344
    %v382 = vunpack.c.l.b16 %v345
    %v383 = vunpack.c.l.b16 %v346
    %v384 = vunpack.c.l.b16 %v347
    %v385 = vpack.c.b16 %v370, %v369
    %v386 = vpack.c.b16 %v372, %v371
    %v387 = vpack.c.b16 %v374, %v373
    %v388 = vpack.c.b16 %v376, %v375
    %v389 = vpack.c.b16 %v378, %v377
    %v390 = vpack.c.b16 %v380, %v379
    %v391 = vpack.c.b16 %v382, %v381
    %v392 = vpack.c.b16 %v384, %v383
    %401 = vmatprep.subr.bf16.mxu0 0
    %402 = vmatpush1.bf16.msra.mxu0 %v385
    %403 = vmatprep.subr.bf16.mxu0 0
    %404 = vmatpush1.bf16.msra.mxu0 %v386
    %405 = vmatprep.subr.bf16.mxu0 0
    %406 = vmatpush1.bf16.msra.mxu0 %v387
    %407 = vmatprep.subr.bf16.mxu0 0
    %408 = vmatpush1.bf16.msra.mxu0 %v388
    %409 = vmatprep.subr.bf16.mxu0 0
    %410 = vmatpush1.bf16.msra.mxu0 %v389
    %411 = vmatprep.subr.bf16.mxu0 0
    %412 = vmatpush1.bf16.msra.mxu0 %v390
    %413 = vmatprep.subr.bf16.mxu0 0
    %414 = vmatpush1.bf16.msra.mxu0 %v391
    %415 = vmatprep.subr.bf16.mxu0 0
    %416 = vmatpush1.bf16.msra.mxu0 %v392
    %417 = vmatprep.subr.bf16.mxu0 0
    %418 = vmatpush1.bf16.msra.mxu0 0
    %419 = vmatprep.subr.bf16.mxu0 0
    %420 = vmatpush1.bf16.msra.mxu0 0
    %421 = vmatprep.subr.bf16.mxu0 0
    %422 = vmatpush1.bf16.msra.mxu0 0
    %423 = vmatprep.subr.bf16.mxu0 0
    %424 = vmatpush1.bf16.msra.mxu0 0
    %425 = vmatprep.subr.bf16.mxu0 0
    %426 = vmatpush1.bf16.msra.mxu0 0
    %427 = vmatprep.subr.bf16.mxu0 0
    %428 = vmatpush1.bf16.msra.mxu0 0
    %429 = vmatprep.subr.bf16.mxu0 0
    %430 = vmatpush1.bf16.msra.mxu0 0
    %431 = vmatprep.subr.bf16.mxu0 0
    %432 = vmatpush1.bf16.msra.mxu0 0
    %433 = vmatprep.mubr.bf16.mxu0 0
    %434 = vmatmul.mubr.bf16.gmra.mrb[0].mxu0 %v331
    %v435 = vpop.f32.mrb[0].mxu0
    %v436 = vadd.f32 %v351, %v435
    %v437 = vpop.f32.mrb[0].mxu0
    %v438 = vpop.f32.mrb[0].mxu0
    %v439 = vpop.f32.mrb[0].mxu0
    %440 = vdwg.mxu0
    %441 = vst [vmem:[%s4] sm:$0xff] %v436
    %443 = vset.pattern.permute.xlu0 0
    %444 = vperm.xlu0 %443, %v330
    %v445 = vpop.permute.xlu0 %444
    %v447 = vadd.f32 %v318, %v445
    %448 = vst [vmem:[%s5] sm:$0xff] %v447
    %449 = vadd.xlane.f32.xlu0 %v253
    %v450 = vpop.xlane.xlu0 %449
    %v451 = vmul.f32 %v450, 0.03125
    %452 = vadd.xlane.f32.xlu0 %v323
    %v453 = vpop.xlane.xlu0 %452
    %v454 = vmul.f32 %v453, 0.03125
    %455 = vadd.xlane.f32.xlu0 %v326
    %v456 = vpop.xlane.xlu0 %455
    %v457 = vmul.f32 %v456, 0.03125
    %v458 = vmul.f32 %v454, %v454
    %v459 = vrot.slane %v458, 4
    %v460 = vadd.f32 %v458, %v459
    %v461 = vrot.slane %v460, 2
    %v462 = vadd.f32 %v460, %v461
    %v463 = vrot.slane %v462, 1
    %v464 = vadd.f32 %v462, %v463
    %v465 = vrsqrt.pop %v464
    %v466 = vmul.f32 %v464, %v465
    %vm467 = vcmp.eq.f32.partialorder %v464, inf
    %v468 = vsel %vm467, %v464, %v466
    %vm469 = vcmp.eq.f32.partialorder %v464, 0.0
    %v470 = vand.u32 %v464, 2147483648
    %v471 = vsel %vm469, %v470, %v468
    %v472 = vmul.f32 %v451, %v457
    %v473 = vrot.slane %v472, 4
    %v474 = vadd.f32 %v472, %v473
    %v475 = vrot.slane %v474, 2
    %v476 = vadd.f32 %v474, %v475
    %v477 = vrot.slane %v476, 1
    %v478 = vadd.f32 %v476, %v477
    %v479 = vmul.f32 %v478, -32.0
    %v480 = vmul.f32 %v471, 1.442695
    %v481 = vpow.pop %v480
    %v482 = vsub.f32 0.0, %v471
    %v483 = vmul.f32 %v482, 1.442695
    %v484 = vpow.pop %v483
    %v485 = vsub.f32 %v481, %v484
    %v486 = vrcp.pop %v471
    %v487 = vmul.f32 %v485, %v486
    %v488 = vlog2.pop %v487
    %v489 = vmul.f32 %v488, 0.6931472
    %v490 = vmul.f32 %v489, 32.0
    %v491 = vlog2.pop %v471
    %v492 = vmul.f32 %v491, 0.6931472
    %v493 = vsub.f32 %v471, %v492
    %v494 = vmul.f32 %v493, 32.0
    %vm495 = vcmp.gt.f32.partialorder %v471, 20.0
    %v496 = vsel %vm495, %v494, %v490
    %v497 = vadd.f32 %v479, %v496
    %vm498 = vcmask 0
    %499 = vst.msk [vmem:[#allocation2] sm:$0x1] %vm498, %v497
    // Predicated region
    $region18: #{simcomen_forward.1} parent=1 // pred_check
      _
    $region19: #{simcomen_forward.1} parent=1 // pred_check_branch
      %501 = sbr.rel (0) target = $region21
    $region20: #{simcomen_forward.1} parent=1 // pred_region
      _
    $region21: #{simcomen_forward.1} parent=1 // pred_fallthru
      _
    // Predicated region
    $region22: #{simcomen_forward.1} parent=1 // pred_check
      _
    $region23: #{simcomen_forward.1} parent=1 // pred_check_branch
      %503 = sbr.rel (0) target = $region25
    $region24: #{simcomen_forward.1} parent=1 // pred_region
      _
    $region25: #{simcomen_forward.1} parent=1 // pred_fallthru
      _
    // Predicated region
    $region26: #{simcomen_forward.1} parent=1 // pred_check
      _
    $region27: #{simcomen_forward.1} parent=1 // pred_check_branch
      %505 = sbr.rel (0) target = $region29
    $region28: #{simcomen_forward.1} parent=1 // pred_region
      %s507 = ssub.s32 16, 16
      %508 = vsyncadd [#allocation3], %s507
      %s510 = sshll.u32 [#allocation2], 4
      %s511 = int_to_ptr.vmem [resolvable:$true] %s510
      %513 = dma.vmem_to_hbm [thread:$0]  %s511, 16, %s6, [#allocation3]
    $region29: #{simcomen_forward.1} parent=1 // pred_fallthru
      _
    // Predicated region
    $region30: #{simcomen_forward.1} parent=1 // pred_check
      _
    $region31: #{simcomen_forward.1} parent=1 // pred_check_branch
      %515 = sbr.rel (0) target = $region33
    $region32: #{simcomen_forward.1} parent=1 // pred_region
      _
    $region33: #{simcomen_forward.1} parent=1 // pred_fallthru
      _
    // Predicated region
    $region34: #{simcomen_forward.1} parent=1 // pred_check
      _
    $region35: #{simcomen_forward.1} parent=1 // pred_check_branch
      %517 = sbr.rel (0) target = $region37
    $region36: #{simcomen_forward.1} parent=1 // pred_region
      _
    $region37: #{simcomen_forward.1} parent=1 // pred_fallthru
      _
    // Predicated region
    $region38: #{simcomen_forward.1} parent=1 // pred_check
      _
    $region39: #{simcomen_forward.1} parent=1 // pred_check_branch
      %519 = sbr.rel (0) target = $region41
    $region40: #{simcomen_forward.1} parent=1 // pred_region
      %520 = dma.done [#allocation3], 16
    $region41: #{simcomen_forward.1} parent=1 // pred_fallthru
      _
    %521 = vsyncpa [#allocation3], 1

</llo_original>
